<compile_context>
chip_gen: v7x
topology: tpu7x:2x2x1
jax: 0.10.0
libtpu: 0.0.40
codegen_flags: <defaults>
</compile_context>

<pallas_src>
import functools

import jax
import jax.numpy as jnp
from jax.experimental import pallas as pl
from jax.experimental.pallas import tpu as pltpu


def _round_up(x, m):
    return (x + m - 1) // m * m


_VMEM_BUDGET_BYTES = 20 * 1024 * 1024  # per-tile working-set target (< 32 MiB scoped)


def _lstm_kernel(x_ref, wih_ref, bias_ref, whh_ref, h0_ref, c0_ref, hN_ref, xp_ref):
    """One batch tile of the LSTM recurrence.

    x_ref   : (T*TB, D)  raw inputs for this tile, time-major (row = t*TB + r)
    wih_ref : (D, G)     W_ih^T, gates packed [i|f|g|o] along lanes (G = 4H <= 128)
    bias_ref: (1, G)     b_ih + b_hh
    whh_ref : (H, G)     W_hh^T, gates packed
    h0_ref  : (TB, H)    initial hidden state
    c0_ref  : (TB, H)    initial cell state
    hN_ref  : (TB, H)    output: final hidden state h_n
    xp_ref  : (T*TB, G)  VMEM scratch for the precomputed input projection
    """
    TTB, _ = x_ref.shape
    TB, H = h0_ref.shape
    G = 4 * H
    T = TTB // TB

    # Off the serial path: x @ W_ih^T + bias for ALL time steps as one MXU matmul,
    # staged into VMEM scratch (no HBM roundtrip, no per-step projection).
    xp_ref[...] = (
        jnp.dot(x_ref[...], wih_ref[...], preferred_element_type=jnp.float32)
        + bias_ref[...]
    )

    # Lane masks for the packed-gate activation: g-lanes get tanh, i/f/o lanes
    # get sigmoid(x) = 0.5 * tanh(0.5 * x) + 0.5  -> ONE EUP tanh per step
    # covers all four gates.
    lane = jax.lax.broadcasted_iota(jnp.int32, (TB, G), 1)
    is_g = (lane >= 2 * H) & (lane < 3 * H)
    pre_scale = jnp.where(is_g, 1.0, 0.5).astype(jnp.float32)

    def step(t, carry):
        h, c = carry
        row = pl.multiple_of(t * TB, TB)
        # Only the (TB,H)@(H,G) recurrent matmul is on the serial path.
        gates = xp_ref[pl.ds(row, TB), :] + jnp.dot(
            h, whh_ref[...], preferred_element_type=jnp.float32)
        t_all = jnp.tanh(gates * pre_scale)                 # single EUP op
        act = jnp.where(is_g, t_all, 0.5 * t_all + 0.5)     # sigmoid via tanh
        i_g = act[:, 0 * H:1 * H]
        f_g = act[:, 1 * H:2 * H]
        g_g = act[:, 2 * H:3 * H]
        o_g = act[:, 3 * H:4 * H]
        c = f_g * c + i_g * g_g
        h = o_g * jnp.tanh(c)
        return h, c

    # Bounded unroll: full for short T, capped for long T (vreg pressure / code size).
    h, _ = jax.lax.fori_loop(0, T, step, (h0_ref[...], c0_ref[...]),
                             unroll=min(T, 8))
    hN_ref[...] = h


@functools.partial(jax.jit, static_argnames=("batch_tile",))
def lstm_forward(x_btd, h0, c0, w_ih, w_hh, b_ih, b_hh, w_lin, b_lin,
                 *, batch_tile=256):
    """x_btd: (B, T, D) float32 (PyTorch batch_first layout). Returns (B, O)."""
    B, T, D = x_btd.shape
    H = h0.shape[-1]
    G = 4 * H
    f32 = jnp.float32

    if G > 128:
        # TODO(synk): per-gate 128-lane tiling path for hidden_dim > 32.
        raise NotImplementedError("packed-gate kernel requires 4*hidden_dim <= 128")

    # ---- batch tiling -------------------------------------------------------
    Bp8 = _round_up(B, 8)
    TB = min(_round_up(batch_tile, 8), Bp8)
    if Bp8 >= 16:
        # v7x: keep >= 2 tiles so the "parallel" axis can span both TensorCores.
        TB = min(TB, _round_up((Bp8 + 1) // 2, 8))
    # VMEM cap (scales with T): double-buffered x block + xp scratch + states.
    per_row = 4 * (T * (2 * D + G) + 8 * H)
    tb_cap = max(8, (_VMEM_BUDGET_BYTES // max(per_row, 1)) // 8 * 8)
    TB = max(8, min(TB, tb_cap))
    Bp = _round_up(Bp8, TB)
    nb = Bp // TB

    # ---- operand prep (layout plumbing only; heavy math lives in the kernel) -
    wih_t = w_ih.T.astype(f32)                          # (D, G)
    whh_t = w_hh.T.astype(f32)                          # (H, G)
    bias = (b_ih + b_hh).astype(f32).reshape(1, G)      # (1, G)

    x_t = jnp.transpose(x_btd.astype(f32), (1, 0, 2))   # (T, B, D) time-major
    x_t = jnp.pad(x_t, ((0, 0), (0, Bp - B), (0, 0)))   # (T, Bp, D)
    # Per-batch-tile contiguous, pre-flattened (time-major inside the tile).
    x_tiles = (x_t.reshape(T, nb, TB, D)
                   .transpose(1, 0, 2, 3)
                   .reshape(nb, T * TB, D))

    h0p = jnp.pad(h0.astype(f32), ((0, Bp - B), (0, 0)))
    c0p = jnp.pad(c0.astype(f32), ((0, Bp - B), (0, 0)))

    grid_spec = pltpu.PrefetchScalarGridSpec(
        num_scalar_prefetch=0,
        grid=(nb,),                                            # batch tiles only
        in_specs=[
            pl.BlockSpec((None, T * TB, D), lambda b: (b, 0, 0)),  # x tile
            pl.BlockSpec((D, G), lambda b: (0, 0)),                # W_ih^T
            pl.BlockSpec((1, G), lambda b: (0, 0)),                # bias
            pl.BlockSpec((H, G), lambda b: (0, 0)),                # W_hh^T
            pl.BlockSpec((TB, H), lambda b: (b, 0)),               # h0 tile
            pl.BlockSpec((TB, H), lambda b: (b, 0)),               # c0 tile
        ],
        out_specs=pl.BlockSpec((TB, H), lambda b: (b, 0)),         # h_n tile
        scratch_shapes=[pltpu.VMEM((T * TB, G), f32)],             # x-projection
    )

    h_n = pl.pallas_call(
        _lstm_kernel,
        out_shape=jax.ShapeDtypeStruct((Bp, H), f32),
        grid_spec=grid_spec,
        compiler_params=pltpu.CompilerParams(
            dimension_semantics=("parallel",),            # batch-parallel
            vmem_limit_bytes=32 * 1024 * 1024),           # v5e default is only 16 MiB
    )(x_tiles, wih_t, bias, whh_t, h0p, c0p)

    # layer_dim == 1 -> feature_map == h_n; tiny lane-sparse head stays in XLA.
    h_n = h_n[:B]
    return h_n @ w_lin.T.astype(f32) + b_lin.astype(f32)


def _reference(x_btd, h0, c0, w_ih, w_hh, b_ih, b_hh, w_lin, b_lin):
    """Pure-JAX reference (lax.scan) mirroring torch.nn.LSTM semantics."""
    H = h0.shape[-1]
    hi = jax.lax.Precision.HIGHEST

    def step(carry, x_t):
        h, c = carry
        gates = (jnp.dot(x_t, w_ih.T, precision=hi)
                 + jnp.dot(h, w_hh.T, precision=hi) + b_ih + b_hh)
        i = jax.nn.sigmoid(gates[:, 0 * H:1 * H])
        f = jax.nn.sigmoid(gates[:, 1 * H:2 * H])
        g = jnp.tanh(gates[:, 2 * H:3 * H])
        o = jax.nn.sigmoid(gates[:, 3 * H:4 * H])
        c = f * c + i * g
        h = o * jnp.tanh(c)
        return (h, c), None

    (h_n, _), _ = jax.lax.scan(step, (h0, c0), jnp.transpose(x_btd, (1, 0, 2)))
    return h_n @ w_lin.T + b_lin


if __name__ == "__main__":
    # Small shapes consistent with the module's forward.
    B, T = 8, 8                    # batch, sequence length
    input_dim, hidden_dim = 16, 32
    layer_dim, output_dim = 1, 8   # forward only valid for layer_dim == 1

    key = jax.random.PRNGKey(0)
    ks = jax.random.split(key, 10)
    bound = 1.0 / (hidden_dim ** 0.5)

    x = jax.random.normal(ks[0], (B, T, input_dim), jnp.float32)
    # h0 ~ randn, c0 ~ rand (matches torch.randn / torch.rand in forward)
    h0 = jax.random.normal(ks[1], (B, hidden_dim), jnp.float32)
    c0 = jax.random.uniform(ks[2], (B, hidden_dim), jnp.float32)

    w_ih = jax.random.uniform(ks[3], (4 * hidden_dim, input_dim), jnp.float32,
                              -bound, bound)
    w_hh = jax.random.uniform(ks[4], (4 * hidden_dim, hidden_dim), jnp.float32,
                              -bound, bound)
    b_ih = jax.random.uniform(ks[5], (4 * hidden_dim,), jnp.float32, -bound, bound)
    b_hh = jax.random.uniform(ks[6], (4 * hidden_dim,), jnp.float32, -bound, bound)
    w_lin = jax.random.uniform(ks[7], (output_dim, hidden_dim), jnp.float32,
                               -bound, bound)
    b_lin = jax.random.uniform(ks[8], (output_dim,), jnp.float32, -bound, bound)

    out = lstm_forward(x, h0, c0, w_ih, w_hh, b_ih, b_hh, w_lin, b_lin)
    out = jax.block_until_ready(out)

    ref = _reference(x, h0, c0, w_ih, w_hh, b_ih, b_hh, w_lin, b_lin)
    assert out.shape == (B, output_dim)
    assert jnp.allclose(out, ref, atol=2e-5, rtol=1e-5), (
        "mismatch vs JAX reference: max|diff|=%e" % float(jnp.max(jnp.abs(out - ref))))

    print("KERNEL_OK")
</pallas_src>

<mosaic_0001>
module attributes {stable_mosaic.version = 11 : i64} {
  func.func @_lstm_kernel(%arg0: i32, %arg1: memref<1x64x16xf32, #tpu.memory_space<vmem>>, %arg2: memref<16x128xf32, #tpu.memory_space<vmem>>, %arg3: memref<1x128xf32, #tpu.memory_space<vmem>>, %arg4: memref<32x128xf32, #tpu.memory_space<vmem>>, %arg5: memref<8x32xf32, #tpu.memory_space<vmem>>, %arg6: memref<8x32xf32, #tpu.memory_space<vmem>>, %arg7: memref<8x32xf32, #tpu.memory_space<vmem>>, %arg8: memref<64x128xf32, #tpu.memory_space<vmem>>) attributes {dimension_semantics = [#tpu.dimension_semantics<parallel>], iteration_bounds = array<i64: 1>, scalar_prefetch = 0 : i64, scratch_operands = 1 : i64, tpu.core_type = #tpu.core_type<tc>, window_params = [{transform_indices = @transform_0, window_bounds = array<i64: 1, 64, 16>}, {pipeline_mode = #tpu.pipeline_mode<synchronous>, transform_indices = @transform_1, window_bounds = array<i64: 16, 128>}, {pipeline_mode = #tpu.pipeline_mode<synchronous>, transform_indices = @transform_2, window_bounds = array<i64: 1, 128>}, {pipeline_mode = #tpu.pipeline_mode<synchronous>, transform_indices = @transform_3, window_bounds = array<i64: 32, 128>}, {transform_indices = @transform_4, window_bounds = array<i64: 8, 32>}, {transform_indices = @transform_5, window_bounds = array<i64: 8, 32>}, {transform_indices = @transform_6, window_bounds = array<i64: 8, 32>}]} {
    %c0 = arith.constant 0 : index
    %c0_0 = arith.constant 0 : index
    %c0_1 = arith.constant 0 : index
    %0 = vector.load %arg1[%c0, %c0_0, %c0_1] : memref<1x64x16xf32, #tpu.memory_space<vmem>>, vector<1x64x16xf32>
    %1 = vector.shape_cast %0 : vector<1x64x16xf32> to vector<64x16xf32>
    %c0_2 = arith.constant 0 : index
    %c0_3 = arith.constant 0 : index
    %2 = vector.load %arg2[%c0_2, %c0_3] : memref<16x128xf32, #tpu.memory_space<vmem>>, vector<16x128xf32>
    %cst = arith.constant dense<0.000000e+00> : vector<64x128xf32>
    %3 = tpu.matmul %1, %2, %cst {dimension_numbers = #tpu.dot_dimension_numbers<[1], [0], [0], [1], [0, 0, 1, 1], [], []>} : vector<64x16xf32>, vector<16x128xf32>, vector<64x128xf32> -> vector<64x128xf32>
    %c0_4 = arith.constant 0 : index
    %c0_5 = arith.constant 0 : index
    %4 = vector.load %arg3[%c0_4, %c0_5] : memref<1x128xf32, #tpu.memory_space<vmem>>, vector<1x128xf32>
    %5 = vector.broadcast %4 : vector<1x128xf32> to vector<64x128xf32>
    %6 = arith.addf %3, %5 : vector<64x128xf32>
    %c0_6 = arith.constant 0 : index
    %c0_7 = arith.constant 0 : index
    %7 = vector.load %arg8[%c0_6, %c0_7] : memref<64x128xf32, #tpu.memory_space<vmem>>, vector<64x128xf32>
    tpu.vector_store %arg8[%c0_6, %c0_7], %6 {strides = array<i32>} : memref<64x128xf32, #tpu.memory_space<vmem>>, vector<64x128xf32>,
    %8 = tpu.iota {dimensions = array<i32: 1>} : vector<8x128xi32>
    %c64_i32 = arith.constant 64 : i32
    %9 = vector.broadcast %c64_i32 : i32 to vector<8x128xi32>
    %10 = arith.cmpi sge, %8, %9 : vector<8x128xi32>
    %c96_i32 = arith.constant 96 : i32
    %11 = vector.broadcast %c96_i32 : i32 to vector<8x128xi32>
    %12 = arith.cmpi slt, %8, %11 : vector<8x128xi32>
    %13 = arith.andi %10, %12 : vector<8x128xi1>
    %cst_8 = arith.constant 1.000000e+00 : f32
    %cst_9 = arith.constant 5.000000e-01 : f32
    %14 = vector.broadcast %cst_8 : f32 to vector<8x128xf32>
    %15 = vector.broadcast %cst_9 : f32 to vector<8x128xf32>
    %16 = arith.select %13, %14, %15 : vector<8x128xi1>, vector<8x128xf32>
    %c0_10 = arith.constant 0 : index
    %c0_11 = arith.constant 0 : index
    %17 = vector.load %arg5[%c0_10, %c0_11] : memref<8x32xf32, #tpu.memory_space<vmem>>, vector<8x32xf32>
    %c0_12 = arith.constant 0 : index
    %c0_13 = arith.constant 0 : index
    %18 = vector.load %arg6[%c0_12, %c0_13] : memref<8x32xf32, #tpu.memory_space<vmem>>, vector<8x32xf32>
    %c0_i32 = arith.constant 0 : i32
    %c8_i32 = arith.constant 8 : i32
    %19 = arith.muli %c0_i32, %c8_i32 : i32
    %20 = tpu.assume_multiple %19, 8 : i32
    %21 = arith.index_cast %20 : i32 to index
    %c0_14 = arith.constant 0 : index
    %22 = vector.load %arg8[%21, %c0_14] : memref<64x128xf32, #tpu.memory_space<vmem>>, vector<8x128xf32>
    %c0_15 = arith.constant 0 : index
    %c0_16 = arith.constant 0 : index
    %23 = vector.load %arg4[%c0_15, %c0_16] : memref<32x128xf32, #tpu.memory_space<vmem>>, vector<32x128xf32>
    %cst_17 = arith.constant dense<0.000000e+00> : vector<8x128xf32>
    %24 = tpu.matmul %17, %23, %cst_17 {dimension_numbers = #tpu.dot_dimension_numbers<[1], [0], [0], [1], [0, 0, 1, 1], [], []>} : vector<8x32xf32>, vector<32x128xf32>, vector<8x128xf32> -> vector<8x128xf32>
    %25 = arith.addf %22, %24 : vector<8x128xf32>
    %26 = arith.mulf %25, %16 : vector<8x128xf32>
    %27 = math.tanh %26 : vector<8x128xf32>
    %cst_18 = arith.constant 5.000000e-01 : f32
    %28 = vector.broadcast %cst_18 : f32 to vector<8x128xf32>
    %29 = arith.mulf %28, %27 : vector<8x128xf32>
    %cst_19 = arith.constant 5.000000e-01 : f32
    %30 = vector.broadcast %cst_19 : f32 to vector<8x128xf32>
    %31 = arith.addf %29, %30 : vector<8x128xf32>
    %32 = arith.select %13, %27, %31 : vector<8x128xi1>, vector<8x128xf32>
    %33 = vector.extract_strided_slice %32 {offsets = [0, 0], sizes = [8, 32], strides = [1, 1]} : vector<8x128xf32> to vector<8x32xf32>
    %34 = vector.extract_strided_slice %32 {offsets = [0, 32], sizes = [8, 32], strides = [1, 1]} : vector<8x128xf32> to vector<8x32xf32>
    %35 = vector.extract_strided_slice %32 {offsets = [0, 64], sizes = [8, 32], strides = [1, 1]} : vector<8x128xf32> to vector<8x32xf32>
    %36 = vector.extract_strided_slice %32 {offsets = [0, 96], sizes = [8, 32], strides = [1, 1]} : vector<8x128xf32> to vector<8x32xf32>
    %37 = arith.mulf %34, %18 : vector<8x32xf32>
    %38 = arith.mulf %33, %35 : vector<8x32xf32>
    %39 = arith.addf %37, %38 : vector<8x32xf32>
    %40 = math.tanh %39 : vector<8x32xf32>
    %41 = arith.mulf %36, %40 : vector<8x32xf32>
    %c1_i32 = arith.constant 1 : i32
    %c8_i32_20 = arith.constant 8 : i32
    %42 = arith.muli %c1_i32, %c8_i32_20 : i32
    %43 = tpu.assume_multiple %42, 8 : i32
    %44 = arith.index_cast %43 : i32 to index
    %c0_21 = arith.constant 0 : index
    %45 = vector.load %arg8[%44, %c0_21] : memref<64x128xf32, #tpu.memory_space<vmem>>, vector<8x128xf32>
    %c0_22 = arith.constant 0 : index
    %c0_23 = arith.constant 0 : index
    %46 = vector.load %arg4[%c0_22, %c0_23] : memref<32x128xf32, #tpu.memory_space<vmem>>, vector<32x128xf32>
    %cst_24 = arith.constant dense<0.000000e+00> : vector<8x128xf32>
    %47 = tpu.matmul %41, %46, %cst_24 {dimension_numbers = #tpu.dot_dimension_numbers<[1], [0], [0], [1], [0, 0, 1, 1], [], []>} : vector<8x32xf32>, vector<32x128xf32>, vector<8x128xf32> -> vector<8x128xf32>
    %48 = arith.addf %45, %47 : vector<8x128xf32>
    %49 = arith.mulf %48, %16 : vector<8x128xf32>
    %50 = math.tanh %49 : vector<8x128xf32>
    %cst_25 = arith.constant 5.000000e-01 : f32
    %51 = vector.broadcast %cst_25 : f32 to vector<8x128xf32>
    %52 = arith.mulf %51, %50 : vector<8x128xf32>
    %cst_26 = arith.constant 5.000000e-01 : f32
    %53 = vector.broadcast %cst_26 : f32 to vector<8x128xf32>
    %54 = arith.addf %52, %53 : vector<8x128xf32>
    %55 = arith.select %13, %50, %54 : vector<8x128xi1>, vector<8x128xf32>
    %56 = vector.extract_strided_slice %55 {offsets = [0, 0], sizes = [8, 32], strides = [1, 1]} : vector<8x128xf32> to vector<8x32xf32>
    %57 = vector.extract_strided_slice %55 {offsets = [0, 32], sizes = [8, 32], strides = [1, 1]} : vector<8x128xf32> to vector<8x32xf32>
    %58 = vector.extract_strided_slice %55 {offsets = [0, 64], sizes = [8, 32], strides = [1, 1]} : vector<8x128xf32> to vector<8x32xf32>
    %59 = vector.extract_strided_slice %55 {offsets = [0, 96], sizes = [8, 32], strides = [1, 1]} : vector<8x128xf32> to vector<8x32xf32>
    %60 = arith.mulf %57, %39 : vector<8x32xf32>
    %61 = arith.mulf %56, %58 : vector<8x32xf32>
    %62 = arith.addf %60, %61 : vector<8x32xf32>
    %63 = math.tanh %62 : vector<8x32xf32>
    %64 = arith.mulf %59, %63 : vector<8x32xf32>
    %c2_i32 = arith.constant 2 : i32
    %c8_i32_27 = arith.constant 8 : i32
    %65 = arith.muli %c2_i32, %c8_i32_27 : i32
    %66 = tpu.assume_multiple %65, 8 : i32
    %67 = arith.index_cast %66 : i32 to index
    %c0_28 = arith.constant 0 : index
    %68 = vector.load %arg8[%67, %c0_28] : memref<64x128xf32, #tpu.memory_space<vmem>>, vector<8x128xf32>
    %c0_29 = arith.constant 0 : index
    %c0_30 = arith.constant 0 : index
    %69 = vector.load %arg4[%c0_29, %c0_30] : memref<32x128xf32, #tpu.memory_space<vmem>>, vector<32x128xf32>
    %cst_31 = arith.constant dense<0.000000e+00> : vector<8x128xf32>
    %70 = tpu.matmul %64, %69, %cst_31 {dimension_numbers = #tpu.dot_dimension_numbers<[1], [0], [0], [1], [0, 0, 1, 1], [], []>} : vector<8x32xf32>, vector<32x128xf32>, vector<8x128xf32> -> vector<8x128xf32>
    %71 = arith.addf %68, %70 : vector<8x128xf32>
    %72 = arith.mulf %71, %16 : vector<8x128xf32>
    %73 = math.tanh %72 : vector<8x128xf32>
    %cst_32 = arith.constant 5.000000e-01 : f32
    %74 = vector.broadcast %cst_32 : f32 to vector<8x128xf32>
    %75 = arith.mulf %74, %73 : vector<8x128xf32>
    %cst_33 = arith.constant 5.000000e-01 : f32
    %76 = vector.broadcast %cst_33 : f32 to vector<8x128xf32>
    %77 = arith.addf %75, %76 : vector<8x128xf32>
    %78 = arith.select %13, %73, %77 : vector<8x128xi1>, vector<8x128xf32>
    %79 = vector.extract_strided_slice %78 {offsets = [0, 0], sizes = [8, 32], strides = [1, 1]} : vector<8x128xf32> to vector<8x32xf32>
    %80 = vector.extract_strided_slice %78 {offsets = [0, 32], sizes = [8, 32], strides = [1, 1]} : vector<8x128xf32> to vector<8x32xf32>
    %81 = vector.extract_strided_slice %78 {offsets = [0, 64], sizes = [8, 32], strides = [1, 1]} : vector<8x128xf32> to vector<8x32xf32>
    %82 = vector.extract_strided_slice %78 {offsets = [0, 96], sizes = [8, 32], strides = [1, 1]} : vector<8x128xf32> to vector<8x32xf32>
    %83 = arith.mulf %80, %62 : vector<8x32xf32>
    %84 = arith.mulf %79, %81 : vector<8x32xf32>
    %85 = arith.addf %83, %84 : vector<8x32xf32>
    %86 = math.tanh %85 : vector<8x32xf32>
    %87 = arith.mulf %82, %86 : vector<8x32xf32>
    %c3_i32 = arith.constant 3 : i32
    %c8_i32_34 = arith.constant 8 : i32
    %88 = arith.muli %c3_i32, %c8_i32_34 : i32
    %89 = tpu.assume_multiple %88, 8 : i32
    %90 = arith.index_cast %89 : i32 to index
    %c0_35 = arith.constant 0 : index
    %91 = vector.load %arg8[%90, %c0_35] : memref<64x128xf32, #tpu.memory_space<vmem>>, vector<8x128xf32>
    %c0_36 = arith.constant 0 : index
    %c0_37 = arith.constant 0 : index
    %92 = vector.load %arg4[%c0_36, %c0_37] : memref<32x128xf32, #tpu.memory_space<vmem>>, vector<32x128xf32>
    %cst_38 = arith.constant dense<0.000000e+00> : vector<8x128xf32>
    %93 = tpu.matmul %87, %92, %cst_38 {dimension_numbers = #tpu.dot_dimension_numbers<[1], [0], [0], [1], [0, 0, 1, 1], [], []>} : vector<8x32xf32>, vector<32x128xf32>, vector<8x128xf32> -> vector<8x128xf32>
    %94 = arith.addf %91, %93 : vector<8x128xf32>
    %95 = arith.mulf %94, %16 : vector<8x128xf32>
    %96 = math.tanh %95 : vector<8x128xf32>
    %cst_39 = arith.constant 5.000000e-01 : f32
    %97 = vector.broadcast %cst_39 : f32 to vector<8x128xf32>
    %98 = arith.mulf %97, %96 : vector<8x128xf32>
    %cst_40 = arith.constant 5.000000e-01 : f32
    %99 = vector.broadcast %cst_40 : f32 to vector<8x128xf32>
    %100 = arith.addf %98, %99 : vector<8x128xf32>
    %101 = arith.select %13, %96, %100 : vector<8x128xi1>, vector<8x128xf32>
    %102 = vector.extract_strided_slice %101 {offsets = [0, 0], sizes = [8, 32], strides = [1, 1]} : vector<8x128xf32> to vector<8x32xf32>
    %103 = vector.extract_strided_slice %101 {offsets = [0, 32], sizes = [8, 32], strides = [1, 1]} : vector<8x128xf32> to vector<8x32xf32>
    %104 = vector.extract_strided_slice %101 {offsets = [0, 64], sizes = [8, 32], strides = [1, 1]} : vector<8x128xf32> to vector<8x32xf32>
    %105 = vector.extract_strided_slice %101 {offsets = [0, 96], sizes = [8, 32], strides = [1, 1]} : vector<8x128xf32> to vector<8x32xf32>
    %106 = arith.mulf %103, %85 : vector<8x32xf32>
    %107 = arith.mulf %102, %104 : vector<8x32xf32>
    %108 = arith.addf %106, %107 : vector<8x32xf32>
    %109 = math.tanh %108 : vector<8x32xf32>
    %110 = arith.mulf %105, %109 : vector<8x32xf32>
    %c4_i32 = arith.constant 4 : i32
    %c8_i32_41 = arith.constant 8 : i32
    %111 = arith.muli %c4_i32, %c8_i32_41 : i32
    %112 = tpu.assume_multiple %111, 8 : i32
    %113 = arith.index_cast %112 : i32 to index
    %c0_42 = arith.constant 0 : index
    %114 = vector.load %arg8[%113, %c0_42] : memref<64x128xf32, #tpu.memory_space<vmem>>, vector<8x128xf32>
    %c0_43 = arith.constant 0 : index
    %c0_44 = arith.constant 0 : index
    %115 = vector.load %arg4[%c0_43, %c0_44] : memref<32x128xf32, #tpu.memory_space<vmem>>, vector<32x128xf32>
    %cst_45 = arith.constant dense<0.000000e+00> : vector<8x128xf32>
    %116 = tpu.matmul %110, %115, %cst_45 {dimension_numbers = #tpu.dot_dimension_numbers<[1], [0], [0], [1], [0, 0, 1, 1], [], []>} : vector<8x32xf32>, vector<32x128xf32>, vector<8x128xf32> -> vector<8x128xf32>
    %117 = arith.addf %114, %116 : vector<8x128xf32>
    %118 = arith.mulf %117, %16 : vector<8x128xf32>
    %119 = math.tanh %118 : vector<8x128xf32>
    %cst_46 = arith.constant 5.000000e-01 : f32
    %120 = vector.broadcast %cst_46 : f32 to vector<8x128xf32>
    %121 = arith.mulf %120, %119 : vector<8x128xf32>
    %cst_47 = arith.constant 5.000000e-01 : f32
    %122 = vector.broadcast %cst_47 : f32 to vector<8x128xf32>
    %123 = arith.addf %121, %122 : vector<8x128xf32>
    %124 = arith.select %13, %119, %123 : vector<8x128xi1>, vector<8x128xf32>
    %125 = vector.extract_strided_slice %124 {offsets = [0, 0], sizes = [8, 32], strides = [1, 1]} : vector<8x128xf32> to vector<8x32xf32>
    %126 = vector.extract_strided_slice %124 {offsets = [0, 32], sizes = [8, 32], strides = [1, 1]} : vector<8x128xf32> to vector<8x32xf32>
    %127 = vector.extract_strided_slice %124 {offsets = [0, 64], sizes = [8, 32], strides = [1, 1]} : vector<8x128xf32> to vector<8x32xf32>
    %128 = vector.extract_strided_slice %124 {offsets = [0, 96], sizes = [8, 32], strides = [1, 1]} : vector<8x128xf32> to vector<8x32xf32>
    %129 = arith.mulf %126, %108 : vector<8x32xf32>
    %130 = arith.mulf %125, %127 : vector<8x32xf32>
    %131 = arith.addf %129, %130 : vector<8x32xf32>
    %132 = math.tanh %131 : vector<8x32xf32>
    %133 = arith.mulf %128, %132 : vector<8x32xf32>
    %c5_i32 = arith.constant 5 : i32
    %c8_i32_48 = arith.constant 8 : i32
    %134 = arith.muli %c5_i32, %c8_i32_48 : i32
    %135 = tpu.assume_multiple %134, 8 : i32
    %136 = arith.index_cast %135 : i32 to index
    %c0_49 = arith.constant 0 : index
    %137 = vector.load %arg8[%136, %c0_49] : memref<64x128xf32, #tpu.memory_space<vmem>>, vector<8x128xf32>
    %c0_50 = arith.constant 0 : index
    %c0_51 = arith.constant 0 : index
    %138 = vector.load %arg4[%c0_50, %c0_51] : memref<32x128xf32, #tpu.memory_space<vmem>>, vector<32x128xf32>
    %cst_52 = arith.constant dense<0.000000e+00> : vector<8x128xf32>
    %139 = tpu.matmul %133, %138, %cst_52 {dimension_numbers = #tpu.dot_dimension_numbers<[1], [0], [0], [1], [0, 0, 1, 1], [], []>} : vector<8x32xf32>, vector<32x128xf32>, vector<8x128xf32> -> vector<8x128xf32>
    %140 = arith.addf %137, %139 : vector<8x128xf32>
    %141 = arith.mulf %140, %16 : vector<8x128xf32>
    %142 = math.tanh %141 : vector<8x128xf32>
    %cst_53 = arith.constant 5.000000e-01 : f32
    %143 = vector.broadcast %cst_53 : f32 to vector<8x128xf32>
    %144 = arith.mulf %143, %142 : vector<8x128xf32>
    %cst_54 = arith.constant 5.000000e-01 : f32
    %145 = vector.broadcast %cst_54 : f32 to vector<8x128xf32>
    %146 = arith.addf %144, %145 : vector<8x128xf32>
    %147 = arith.select %13, %142, %146 : vector<8x128xi1>, vector<8x128xf32>
    %148 = vector.extract_strided_slice %147 {offsets = [0, 0], sizes = [8, 32], strides = [1, 1]} : vector<8x128xf32> to vector<8x32xf32>
    %149 = vector.extract_strided_slice %147 {offsets = [0, 32], sizes = [8, 32], strides = [1, 1]} : vector<8x128xf32> to vector<8x32xf32>
    %150 = vector.extract_strided_slice %147 {offsets = [0, 64], sizes = [8, 32], strides = [1, 1]} : vector<8x128xf32> to vector<8x32xf32>
    %151 = vector.extract_strided_slice %147 {offsets = [0, 96], sizes = [8, 32], strides = [1, 1]} : vector<8x128xf32> to vector<8x32xf32>
    %152 = arith.mulf %149, %131 : vector<8x32xf32>
    %153 = arith.mulf %148, %150 : vector<8x32xf32>
    %154 = arith.addf %152, %153 : vector<8x32xf32>
    %155 = math.tanh %154 : vector<8x32xf32>
    %156 = arith.mulf %151, %155 : vector<8x32xf32>
    %c6_i32 = arith.constant 6 : i32
    %c8_i32_55 = arith.constant 8 : i32
    %157 = arith.muli %c6_i32, %c8_i32_55 : i32
    %158 = tpu.assume_multiple %157, 8 : i32
    %159 = arith.index_cast %158 : i32 to index
    %c0_56 = arith.constant 0 : index
    %160 = vector.load %arg8[%159, %c0_56] : memref<64x128xf32, #tpu.memory_space<vmem>>, vector<8x128xf32>
    %c0_57 = arith.constant 0 : index
    %c0_58 = arith.constant 0 : index
    %161 = vector.load %arg4[%c0_57, %c0_58] : memref<32x128xf32, #tpu.memory_space<vmem>>, vector<32x128xf32>
    %cst_59 = arith.constant dense<0.000000e+00> : vector<8x128xf32>
    %162 = tpu.matmul %156, %161, %cst_59 {dimension_numbers = #tpu.dot_dimension_numbers<[1], [0], [0], [1], [0, 0, 1, 1], [], []>} : vector<8x32xf32>, vector<32x128xf32>, vector<8x128xf32> -> vector<8x128xf32>
    %163 = arith.addf %160, %162 : vector<8x128xf32>
    %164 = arith.mulf %163, %16 : vector<8x128xf32>
    %165 = math.tanh %164 : vector<8x128xf32>
    %cst_60 = arith.constant 5.000000e-01 : f32
    %166 = vector.broadcast %cst_60 : f32 to vector<8x128xf32>
    %167 = arith.mulf %166, %165 : vector<8x128xf32>
    %cst_61 = arith.constant 5.000000e-01 : f32
    %168 = vector.broadcast %cst_61 : f32 to vector<8x128xf32>
    %169 = arith.addf %167, %168 : vector<8x128xf32>
    %170 = arith.select %13, %165, %169 : vector<8x128xi1>, vector<8x128xf32>
    %171 = vector.extract_strided_slice %170 {offsets = [0, 0], sizes = [8, 32], strides = [1, 1]} : vector<8x128xf32> to vector<8x32xf32>
    %172 = vector.extract_strided_slice %170 {offsets = [0, 32], sizes = [8, 32], strides = [1, 1]} : vector<8x128xf32> to vector<8x32xf32>
    %173 = vector.extract_strided_slice %170 {offsets = [0, 64], sizes = [8, 32], strides = [1, 1]} : vector<8x128xf32> to vector<8x32xf32>
    %174 = vector.extract_strided_slice %170 {offsets = [0, 96], sizes = [8, 32], strides = [1, 1]} : vector<8x128xf32> to vector<8x32xf32>
    %175 = arith.mulf %172, %154 : vector<8x32xf32>
    %176 = arith.mulf %171, %173 : vector<8x32xf32>
    %177 = arith.addf %175, %176 : vector<8x32xf32>
    %178 = math.tanh %177 : vector<8x32xf32>
    %179 = arith.mulf %174, %178 : vector<8x32xf32>
    %c7_i32 = arith.constant 7 : i32
    %c8_i32_62 = arith.constant 8 : i32
    %180 = arith.muli %c7_i32, %c8_i32_62 : i32
    %181 = tpu.assume_multiple %180, 8 : i32
    %182 = arith.index_cast %181 : i32 to index
    %c0_63 = arith.constant 0 : index
    %183 = vector.load %arg8[%182, %c0_63] : memref<64x128xf32, #tpu.memory_space<vmem>>, vector<8x128xf32>
    %c0_64 = arith.constant 0 : index
    %c0_65 = arith.constant 0 : index
    %184 = vector.load %arg4[%c0_64, %c0_65] : memref<32x128xf32, #tpu.memory_space<vmem>>, vector<32x128xf32>
    %cst_66 = arith.constant dense<0.000000e+00> : vector<8x128xf32>
    %185 = tpu.matmul %179, %184, %cst_66 {dimension_numbers = #tpu.dot_dimension_numbers<[1], [0], [0], [1], [0, 0, 1, 1], [], []>} : vector<8x32xf32>, vector<32x128xf32>, vector<8x128xf32> -> vector<8x128xf32>
    %186 = arith.addf %183, %185 : vector<8x128xf32>
    %187 = arith.mulf %186, %16 : vector<8x128xf32>
    %188 = math.tanh %187 : vector<8x128xf32>
    %cst_67 = arith.constant 5.000000e-01 : f32
    %189 = vector.broadcast %cst_67 : f32 to vector<8x128xf32>
    %190 = arith.mulf %189, %188 : vector<8x128xf32>
    %cst_68 = arith.constant 5.000000e-01 : f32
    %191 = vector.broadcast %cst_68 : f32 to vector<8x128xf32>
    %192 = arith.addf %190, %191 : vector<8x128xf32>
    %193 = arith.select %13, %188, %192 : vector<8x128xi1>, vector<8x128xf32>
    %194 = vector.extract_strided_slice %193 {offsets = [0, 0], sizes = [8, 32], strides = [1, 1]} : vector<8x128xf32> to vector<8x32xf32>
    %195 = vector.extract_strided_slice %193 {offsets = [0, 32], sizes = [8, 32], strides = [1, 1]} : vector<8x128xf32> to vector<8x32xf32>
    %196 = vector.extract_strided_slice %193 {offsets = [0, 64], sizes = [8, 32], strides = [1, 1]} : vector<8x128xf32> to vector<8x32xf32>
    %197 = vector.extract_strided_slice %193 {offsets = [0, 96], sizes = [8, 32], strides = [1, 1]} : vector<8x128xf32> to vector<8x32xf32>
    %198 = arith.mulf %195, %177 : vector<8x32xf32>
    %199 = arith.mulf %194, %196 : vector<8x32xf32>
    %200 = arith.addf %198, %199 : vector<8x32xf32>
    %201 = math.tanh %200 : vector<8x32xf32>
    %202 = arith.mulf %197, %201 : vector<8x32xf32>
    %c8_i32_69 = arith.constant 8 : i32
    %c0_70 = arith.constant 0 : index
    %c0_71 = arith.constant 0 : index
    %203 = vector.load %arg7[%c0_70, %c0_71] : memref<8x32xf32, #tpu.memory_space<vmem>>, vector<8x32xf32>
    tpu.vector_store %arg7[%c0_70, %c0_71], %202 {strides = array<i32>} : memref<8x32xf32, #tpu.memory_space<vmem>>, vector<8x32xf32>,
    return
  }
  func.func @transform_0(%arg0: i32) -> (i32, i32, i32) {
    %c0_i32 = arith.constant 0 : i32
    %c0_i32_0 = arith.constant 0 : i32
    %c0_i32_1 = arith.constant 0 : i32
    return %arg0, %c0_i32, %c0_i32_0 : i32, i32, i32
  }
  func.func @transform_1(%arg0: i32) -> (i32, i32) {
    %c0_i32 = arith.constant 0 : i32
    %c0_i32_0 = arith.constant 0 : i32
    %c0_i32_1 = arith.constant 0 : i32
    return %c0_i32, %c0_i32_0 : i32, i32
  }
  func.func @transform_2(%arg0: i32) -> (i32, i32) {
    %c0_i32 = arith.constant 0 : i32
    %c0_i32_0 = arith.constant 0 : i32
    %c0_i32_1 = arith.constant 0 : i32
    return %c0_i32, %c0_i32_0 : i32, i32
  }
  func.func @transform_3(%arg0: i32) -> (i32, i32) {
    %c0_i32 = arith.constant 0 : i32
    %c0_i32_0 = arith.constant 0 : i32
    %c0_i32_1 = arith.constant 0 : i32
    return %c0_i32, %c0_i32_0 : i32, i32
  }
  func.func @transform_4(%arg0: i32) -> (i32, i32) {
    %c0_i32 = arith.constant 0 : i32
    %c0_i32_0 = arith.constant 0 : i32
    return %arg0, %c0_i32 : i32, i32
  }
  func.func @transform_5(%arg0: i32) -> (i32, i32) {
    %c0_i32 = arith.constant 0 : i32
    %c0_i32_0 = arith.constant 0 : i32
    return %arg0, %c0_i32 : i32, i32
  }
  func.func @transform_6(%arg0: i32) -> (i32, i32) {
    %c0_i32 = arith.constant 0 : i32
    %c0_i32_0 = arith.constant 0 : i32
    return %arg0, %c0_i32 : i32, i32
  }
}

</mosaic_0001>

<llo_original>
// kernel: lstm_forward.1
$region0: #{lstm_forward.1}
  #allocation0 [shape = 'u32[]', space=smem, size = 0x4, offset = 0x4, fixed_abs, tag = 'smem constant byte address 0x4 - core index']
  #allocation1 [shape = 'u32[144,128]{1,0:T(1,128)}', space=vmem, size = 0x12000, scoped, tag = 'internal scratch']
  #allocation2 [shape = 'f32[64,128]{1,0:T(8,128)}', space=vmem, size = 0x8000, scoped, tag = 'scratch operand']
  %s0 = inlined_call_operand.vmem [shape: f32[1,64,16], index: 0, kind: input, shape index: {}]
  %s1 = inlined_call_operand.vmem [shape: f32[16,128], index: 1, kind: input, shape index: {}]
  %s2 = inlined_call_operand.vmem [shape: f32[1,128], index: 2, kind: input, shape index: {}]
  %s3 = inlined_call_operand.vmem [shape: f32[32,128], index: 3, kind: input, shape index: {}]
  %s4 = inlined_call_operand.vmem [shape: f32[8,32], index: 4, kind: input, shape index: {}]
  %s5 = inlined_call_operand.vmem [shape: f32[8,32], index: 5, kind: input, shape index: {}]
  %s6 = inlined_call_operand.vmem [shape: f32[8,32], index: 6, kind: output, shape index: {}]
  %s7 = sld [smem:[#allocation0]]
  $region34: #{lstm_forward.1} parent=0
    _
  %s9 = ssub.s32 1, %s7
  %s10 = scalar_select 0, %s9, %s7
  // Predicated region
  $region2: #{lstm_forward.1} parent=0 // pred_check
    _
  $region3: #{lstm_forward.1} parent=0 // pred_check_branch
    %12 = sbr.rel (0) target = $region5
  $region4: #{lstm_forward.1} parent=0 // pred_region
    _
  $region5: #{lstm_forward.1} parent=0 // pred_fallthru
    _
  // Predicated region
  $region6: #{lstm_forward.1} parent=0 // pred_check
    _
  $region7: #{lstm_forward.1} parent=0 // pred_check_branch
    %14 = sbr.rel (0) target = $region9
  $region8: #{lstm_forward.1} parent=0 // pred_region
    _
  $region9: #{lstm_forward.1} parent=0 // pred_fallthru
    _
  // Predicated region
  $region10: #{lstm_forward.1} parent=0 // pred_check
    _
  $region11: #{lstm_forward.1} parent=0 // pred_check_branch
    %16 = sbr.rel (0) target = $region13
  $region12: #{lstm_forward.1} parent=0 // pred_region
    _
  $region13: #{lstm_forward.1} parent=0 // pred_fallthru
    _
  // Predicated region
  $region14: #{lstm_forward.1} parent=0 // pred_check
    _
  $region15: #{lstm_forward.1} parent=0 // pred_check_branch
    %18 = sbr.rel (0) target = $region17
  $region16: #{lstm_forward.1} parent=0 // pred_region
    _
  $region17: #{lstm_forward.1} parent=0 // pred_fallthru
    _
  // Predicated region
  $region18: #{lstm_forward.1} parent=0 // pred_check
    _
  $region19: #{lstm_forward.1} parent=0 // pred_check_branch
    %20 = sbr.rel (0) target = $region21
  $region20: #{lstm_forward.1} parent=0 // pred_region
    _
  $region21: #{lstm_forward.1} parent=0 // pred_fallthru
    _
  // Predicated region
  $region22: #{lstm_forward.1} parent=0 // pred_check
    _
  $region23: #{lstm_forward.1} parent=0 // pred_check_branch
    %22 = sbr.rel (0) target = $region25
  $region24: #{lstm_forward.1} parent=0 // pred_region
    _
  $region25: #{lstm_forward.1} parent=0 // pred_fallthru
    _
  %v23 = vld [vmem:[%s0] sm:$0xff]
  %v24 = vld [vmem:[%s0 + $0x8] sm:$0xff]
  %v25 = vld [vmem:[%s0 + $0x10] sm:$0xff]
  %v26 = vld [vmem:[%s0 + $0x18] sm:$0xff]
  %v27 = vld [vmem:[%s0 + $0x20] sm:$0xff]
  %v28 = vld [vmem:[%s0 + $0x28] sm:$0xff]
  %v29 = vld [vmem:[%s0 + $0x30] sm:$0xff]
  %v30 = vld [vmem:[%s0 + $0x38] sm:$0xff]
  %v31 = vld [vmem:[%s1] sm:$0xff]
  %v32 = vld [vmem:[%s1 + $0x8] sm:$0xff]
  %v33 = vld [vmem:[%s2] sm:$0x1]
  %v35 = vlaneseq
  %v36 = vshrl.u32 %v35, 7
  %v37 = vsub.s32 0, %v36
  %v38 = vrot.slane %v33, %v37
  %vm40 = vcmask 130048
  %v42 = vsel %vm40, %v23, 0
  %v45 = vsel %vm40, %v24, 0
  %v48 = vsel %vm40, %v25, 0
  %v51 = vsel %vm40, %v26, 0
  %v54 = vsel %vm40, %v27, 0
  %v57 = vsel %vm40, %v28, 0
  %v60 = vsel %vm40, %v29, 0
  %v63 = vsel %vm40, %v30, 0
  %65 = vmatprep.subr.mxu0 0.0
  %66 = vmatpush1.msra.mxu0 %v31
  %67 = vmatprep.subr.mxu0 0.0
  %68 = vmatpush1.msra.mxu0 %v32
  %69 = vmatprep.subr.mxu0 0.0
  %70 = vmatpush1.msra.mxu0 0.0
  %71 = vmatprep.subr.mxu0 0.0
  %72 = vmatpush1.msra.mxu0 0.0
  %73 = vmatprep.subr.mxu0 0.0
  %74 = vmatpush1.msra.mxu0 0.0
  %75 = vmatprep.subr.mxu0 0.0
  %76 = vmatpush1.msra.mxu0 0.0
  %77 = vmatprep.subr.mxu0 0.0
  %78 = vmatpush1.msra.mxu0 0.0
  %79 = vmatprep.subr.mxu0 0.0
  %80 = vmatpush1.msra.mxu0 0.0
  %81 = vmatprep.subr.mxu0 0.0
  %82 = vmatpush1.msra.mxu0 0.0
  %83 = vmatprep.subr.mxu0 0.0
  %84 = vmatpush1.msra.mxu0 0.0
  %85 = vmatprep.subr.mxu0 0.0
  %86 = vmatpush1.msra.mxu0 0.0
  %87 = vmatprep.subr.mxu0 0.0
  %88 = vmatpush1.msra.mxu0 0.0
  %89 = vmatprep.subr.mxu0 0.0
  %90 = vmatpush1.msra.mxu0 0.0
  %91 = vmatprep.subr.mxu0 0.0
  %92 = vmatpush1.msra.mxu0 0.0
  %93 = vmatprep.subr.mxu0 0.0
  %94 = vmatpush1.msra.mxu0 0.0
  %95 = vmatprep.subr.mxu0 0.0
  %96 = vmatpush1.msra.mxu0 0.0
  %97 = vmatprep.subr.mxu0 0.0
  %98 = vmatpush1.msra.mxu0 0.0
  %99 = vmatprep.subr.mxu0 0.0
  %100 = vmatpush1.msra.mxu0 0.0
  %101 = vmatprep.subr.mxu0 0.0
  %102 = vmatpush1.msra.mxu0 0.0
  %103 = vmatprep.subr.mxu0 0.0
  %104 = vmatpush1.msra.mxu0 0.0
  %105 = vmatprep.subr.mxu0 0.0
  %106 = vmatpush1.msra.mxu0 0.0
  %107 = vmatprep.subr.mxu0 0.0
  %108 = vmatpush1.msra.mxu0 0.0
  %109 = vmatprep.subr.mxu0 0.0
  %110 = vmatpush1.msra.mxu0 0.0
  %111 = vmatprep.subr.mxu0 0.0
  %112 = vmatpush1.msra.mxu0 0.0
  %113 = vmatprep.subr.mxu0 0.0
  %114 = vmatpush1.msra.mxu0 0.0
  %115 = vmatprep.subr.mxu0 0.0
  %116 = vmatpush1.msra.mxu0 0.0
  %117 = vmatprep.subr.mxu0 0.0
  %118 = vmatpush1.msra.mxu0 0.0
  %119 = vmatprep.subr.mxu0 0.0
  %120 = vmatpush1.msra.mxu0 0.0
  %121 = vmatprep.subr.mxu0 0.0
  %122 = vmatpush1.msra.mxu0 0.0
  %123 = vmatprep.subr.mxu0 0.0
  %124 = vmatpush1.msra.mxu0 0.0
  %125 = vmatprep.subr.mxu0 0.0
  %126 = vmatpush1.msra.mxu0 0.0
  %127 = vmatprep.subr.mxu0 0.0
  %128 = vmatpush1.msra.mxu0 0.0
  %129 = vmatprep.mubr.f32.mxu0 0.0
  %130 = vmatmul.mubr.f32.gmra.mrb[0].mxu0 %v42
  %v131 = vpop.f32.mrb[0].mxu0
  %v132 = vadd.f32 %v38, %v131
  %v133 = vpop.f32.mrb[0].mxu0
  %134 = vmatprep.mubr.f32.mxu0 0.0
  %135 = vmatmul.mubr.f32.gmra.mrb[0].mxu0 %v45
  %v136 = vpop.f32.mrb[0].mxu0
  %v137 = vadd.f32 %v38, %v136
  %v138 = vpop.f32.mrb[0].mxu0
  %139 = vmatprep.mubr.f32.mxu0 0.0
  %140 = vmatmul.mubr.f32.gmra.mrb[0].mxu0 %v48
  %v141 = vpop.f32.mrb[0].mxu0
  %v142 = vadd.f32 %v38, %v141
  %v143 = vpop.f32.mrb[0].mxu0
  %144 = vmatprep.mubr.f32.mxu0 0.0
  %145 = vmatmul.mubr.f32.gmra.mrb[0].mxu0 %v51
  %v146 = vpop.f32.mrb[0].mxu0
  %v147 = vadd.f32 %v38, %v146
  %v148 = vpop.f32.mrb[0].mxu0
  %149 = vmatprep.mubr.f32.mxu0 0.0
  %150 = vmatmul.mubr.f32.gmra.mrb[0].mxu0 %v54
  %v151 = vpop.f32.mrb[0].mxu0
  %v152 = vadd.f32 %v38, %v151
  %v153 = vpop.f32.mrb[0].mxu0
  %154 = vmatprep.mubr.f32.mxu0 0.0
  %155 = vmatmul.mubr.f32.gmra.mrb[0].mxu0 %v57
  %v156 = vpop.f32.mrb[0].mxu0
  %v157 = vadd.f32 %v38, %v156
  %v158 = vpop.f32.mrb[0].mxu0
  %159 = vmatprep.mubr.f32.mxu0 0.0
  %160 = vmatmul.mubr.f32.gmra.mrb[0].mxu0 %v60
  %v161 = vpop.f32.mrb[0].mxu0
  %v162 = vadd.f32 %v38, %v161
  %v163 = vpop.f32.mrb[0].mxu0
  %164 = vmatprep.mubr.f32.mxu0 0.0
  %165 = vmatmul.mubr.f32.gmra.mrb[0].mxu0 %v63
  %v166 = vpop.f32.mrb[0].mxu0
  %v167 = vadd.f32 %v38, %v166
  %v168 = vpop.f32.mrb[0].mxu0
  %169 = vdwg.mxu0
  %170 = vst [vmem:[#allocation2] sm:$0xff] %v132
  %171 = vst [vmem:[#allocation2 + $0x8] sm:$0xff] %v137
  %172 = vst [vmem:[#allocation2 + $0x10] sm:$0xff] %v142
  %173 = vst [vmem:[#allocation2 + $0x18] sm:$0xff] %v147
  %174 = vst [vmem:[#allocation2 + $0x20] sm:$0xff] %v152
  %175 = vst [vmem:[#allocation2 + $0x28] sm:$0xff] %v157
  %176 = vst [vmem:[#allocation2 + $0x30] sm:$0xff] %v162
  %177 = vst [vmem:[#allocation2 + $0x38] sm:$0xff] %v167
  %v178 = vlaneseq
  %v179 = vand.u32 %v178, 127
  %vm180 = vcmp.ge.s32.totalorder %v179, 64
  %vm181 = vcmp.lt.s32.totalorder %v179, 96
  %vm182 = vmand %vm180, %vm181
  %v183 = vsel %vm182, 1.0, 0.5
  %v184 = vld [vmem:[%s4] sm:$0xff]
  %v185 = vld [vmem:[%s5] sm:$0xff]
  %v186 = vld [vmem:[#allocation2] sm:$0xff]
  %v187 = vld [vmem:[%s3] sm:$0xff]
  %v188 = vld [vmem:[%s3 + $0x8] sm:$0xff]
  %v189 = vld [vmem:[%s3 + $0x10] sm:$0xff]
  %v190 = vld [vmem:[%s3 + $0x18] sm:$0xff]
  %vm191 = vcmask 261120
  %v193 = vsel %vm191, %v184, 0
  %195 = vmatprep.subr.mxu0 0.0
  %196 = vmatpush1.msra.mxu0 %v187
  %197 = vmatprep.subr.mxu0 0.0
  %198 = vmatpush1.msra.mxu0 %v188
  %199 = vmatprep.subr.mxu0 0.0
  %200 = vmatpush1.msra.mxu0 %v189
  %201 = vmatprep.subr.mxu0 0.0
  %202 = vmatpush1.msra.mxu0 %v190
  %203 = vmatprep.subr.mxu0 0.0
  %204 = vmatpush1.msra.mxu0 0.0
  %205 = vmatprep.subr.mxu0 0.0
  %206 = vmatpush1.msra.mxu0 0.0
  %207 = vmatprep.subr.mxu0 0.0
  %208 = vmatpush1.msra.mxu0 0.0
  %209 = vmatprep.subr.mxu0 0.0
  %210 = vmatpush1.msra.mxu0 0.0
  %211 = vmatprep.subr.mxu0 0.0
  %212 = vmatpush1.msra.mxu0 0.0
  %213 = vmatprep.subr.mxu0 0.0
  %214 = vmatpush1.msra.mxu0 0.0
  %215 = vmatprep.subr.mxu0 0.0
  %216 = vmatpush1.msra.mxu0 0.0
  %217 = vmatprep.subr.mxu0 0.0
  %218 = vmatpush1.msra.mxu0 0.0
  %219 = vmatprep.subr.mxu0 0.0
  %220 = vmatpush1.msra.mxu0 0.0
  %221 = vmatprep.subr.mxu0 0.0
  %222 = vmatpush1.msra.mxu0 0.0
  %223 = vmatprep.subr.mxu0 0.0
  %224 = vmatpush1.msra.mxu0 0.0
  %225 = vmatprep.subr.mxu0 0.0
  %226 = vmatpush1.msra.mxu0 0.0
  %227 = vmatprep.subr.mxu0 0.0
  %228 = vmatpush1.msra.mxu0 0.0
  %229 = vmatprep.subr.mxu0 0.0
  %230 = vmatpush1.msra.mxu0 0.0
  %231 = vmatprep.subr.mxu0 0.0
  %232 = vmatpush1.msra.mxu0 0.0
  %233 = vmatprep.subr.mxu0 0.0
  %234 = vmatpush1.msra.mxu0 0.0
  %235 = vmatprep.subr.mxu0 0.0
  %236 = vmatpush1.msra.mxu0 0.0
  %237 = vmatprep.subr.mxu0 0.0
  %238 = vmatpush1.msra.mxu0 0.0
  %239 = vmatprep.subr.mxu0 0.0
  %240 = vmatpush1.msra.mxu0 0.0
  %241 = vmatprep.subr.mxu0 0.0
  %242 = vmatpush1.msra.mxu0 0.0
  %243 = vmatprep.subr.mxu0 0.0
  %244 = vmatpush1.msra.mxu0 0.0
  %245 = vmatprep.subr.mxu0 0.0
  %246 = vmatpush1.msra.mxu0 0.0
  %247 = vmatprep.subr.mxu0 0.0
  %248 = vmatpush1.msra.mxu0 0.0
  %249 = vmatprep.subr.mxu0 0.0
  %250 = vmatpush1.msra.mxu0 0.0
  %251 = vmatprep.subr.mxu0 0.0
  %252 = vmatpush1.msra.mxu0 0.0
  %253 = vmatprep.subr.mxu0 0.0
  %254 = vmatpush1.msra.mxu0 0.0
  %255 = vmatprep.subr.mxu0 0.0
  %256 = vmatpush1.msra.mxu0 0.0
  %257 = vmatprep.subr.mxu0 0.0
  %258 = vmatpush1.msra.mxu0 0.0
  %259 = vmatprep.mubr.f32.mxu0 0.0
  %260 = vmatmul.mubr.f32.gmra.mrb[0].mxu0 %v193
  %v261 = vpop.f32.mrb[0].mxu0
  %v262 = vadd.f32 0.0, %v261
  %v263 = vpop.f32.mrb[0].mxu0
  %264 = vdwg.mxu0
  %v265 = vadd.f32 %v186, %v262
  %v266 = vmul.f32 %v265, %v183
  %v267 = vtanh.pop %v266
  %v268 = vmul.f32 %v267, 0.5
  %v269 = vadd.f32 %v268, 0.5
  %v270 = vsel %vm182, %v267, %v269
  %272 = vrot.lane.b32.xlu0 %v185, 32
  %v273 = vpop.permute.xlu0 %272
  %v275 = vmul.f32 %v270, %v273
  %277 = vrot.lane.b32.xlu0 %v270, 64
  %v278 = vpop.permute.xlu0 %277
  %v280 = vmul.f32 %v270, %v278
  %282 = vrot.lane.b32.xlu0 %v280, 32
  %v283 = vpop.permute.xlu0 %282
  %v285 = vadd.f32 %v275, %v283
  %v286 = vtanh.pop %v285
  %288 = vrot.lane.b32.xlu0 %v286, 64
  %v289 = vpop.permute.xlu0 %288
  %v291 = vmul.f32 %v270, %v289
  %s292 = scalar_lea.vmem [#allocation2], 8
  %v293 = vld [vmem:[%s292] sm:$0xff]
  %295 = vrot.lane.b32.xlu0 %v291, 32
  %v296 = vpop.permute.xlu0 %295
  %v297 = vsel %vm191, %v296, 0
  %299 = vmatprep.subr.mxu0 0.0
  %300 = vmatpush1.msra.mxu0 %v187
  %301 = vmatprep.subr.mxu0 0.0
  %302 = vmatpush1.msra.mxu0 %v188
  %303 = vmatprep.subr.mxu0 0.0
  %304 = vmatpush1.msra.mxu0 %v189
  %305 = vmatprep.subr.mxu0 0.0
  %306 = vmatpush1.msra.mxu0 %v190
  %307 = vmatprep.subr.mxu0 0.0
  %308 = vmatpush1.msra.mxu0 0.0
  %309 = vmatprep.subr.mxu0 0.0
  %310 = vmatpush1.msra.mxu0 0.0
  %311 = vmatprep.subr.mxu0 0.0
  %312 = vmatpush1.msra.mxu0 0.0
  %313 = vmatprep.subr.mxu0 0.0
  %314 = vmatpush1.msra.mxu0 0.0
  %315 = vmatprep.subr.mxu0 0.0
  %316 = vmatpush1.msra.mxu0 0.0
  %317 = vmatprep.subr.mxu0 0.0
  %318 = vmatpush1.msra.mxu0 0.0
  %319 = vmatprep.subr.mxu0 0.0
  %320 = vmatpush1.msra.mxu0 0.0
  %321 = vmatprep.subr.mxu0 0.0
  %322 = vmatpush1.msra.mxu0 0.0
  %323 = vmatprep.subr.mxu0 0.0
  %324 = vmatpush1.msra.mxu0 0.0
  %325 = vmatprep.subr.mxu0 0.0
  %326 = vmatpush1.msra.mxu0 0.0
  %327 = vmatprep.subr.mxu0 0.0
  %328 = vmatpush1.msra.mxu0 0.0
  %329 = vmatprep.subr.mxu0 0.0
  %330 = vmatpush1.msra.mxu0 0.0
  %331 = vmatprep.subr.mxu0 0.0
  %332 = vmatpush1.msra.mxu0 0.0
  %333 = vmatprep.subr.mxu0 0.0
  %334 = vmatpush1.msra.mxu0 0.0
  %335 = vmatprep.subr.mxu0 0.0
  %336 = vmatpush1.msra.mxu0 0.0
  %337 = vmatprep.subr.mxu0 0.0
  %338 = vmatpush1.msra.mxu0 0.0
  %339 = vmatprep.subr.mxu0 0.0
  %340 = vmatpush1.msra.mxu0 0.0
  %341 = vmatprep.subr.mxu0 0.0
  %342 = vmatpush1.msra.mxu0 0.0
  %343 = vmatprep.subr.mxu0 0.0
  %344 = vmatpush1.msra.mxu0 0.0
  %345 = vmatprep.subr.mxu0 0.0
  %346 = vmatpush1.msra.mxu0 0.0
  %347 = vmatprep.subr.mxu0 0.0
  %348 = vmatpush1.msra.mxu0 0.0
  %349 = vmatprep.subr.mxu0 0.0
  %350 = vmatpush1.msra.mxu0 0.0
  %351 = vmatprep.subr.mxu0 0.0
  %352 = vmatpush1.msra.mxu0 0.0
  %353 = vmatprep.subr.mxu0 0.0
  %354 = vmatpush1.msra.mxu0 0.0
  %355 = vmatprep.subr.mxu0 0.0
  %356 = vmatpush1.msra.mxu0 0.0
  %357 = vmatprep.subr.mxu0 0.0
  %358 = vmatpush1.msra.mxu0 0.0
  %359 = vmatprep.subr.mxu0 0.0
  %360 = vmatpush1.msra.mxu0 0.0
  %361 = vmatprep.subr.mxu0 0.0
  %362 = vmatpush1.msra.mxu0 0.0
  %363 = vmatprep.mubr.f32.mxu0 0.0
  %364 = vmatmul.mubr.f32.gmra.mrb[0].mxu0 %v297
  %v365 = vpop.f32.mrb[0].mxu0
  %v366 = vadd.f32 0.0, %v365
  %v367 = vpop.f32.mrb[0].mxu0
  %368 = vdwg.mxu0
  %v369 = vadd.f32 %v293, %v366
  %v370 = vmul.f32 %v369, %v183
  %v371 = vtanh.pop %v370
  %v372 = vmul.f32 %v371, 0.5
  %v373 = vadd.f32 %v372, 0.5
  %v374 = vsel %vm182, %v371, %v373
  %v375 = vmul.f32 %v374, %v285
  %377 = vrot.lane.b32.xlu0 %v374, 64
  %v378 = vpop.permute.xlu0 %377
  %v380 = vmul.f32 %v374, %v378
  %382 = vrot.lane.b32.xlu0 %v380, 32
  %v383 = vpop.permute.xlu0 %382
  %v385 = vadd.f32 %v375, %v383
  %v386 = vtanh.pop %v385
  %388 = vrot.lane.b32.xlu0 %v386, 64
  %v389 = vpop.permute.xlu0 %388
  %v391 = vmul.f32 %v374, %v389
  %s392 = scalar_lea.vmem [#allocation2], 16
  %v393 = vld [vmem:[%s392] sm:$0xff]
  %395 = vrot.lane.b32.xlu0 %v391, 32
  %v396 = vpop.permute.xlu0 %395
  %v397 = vsel %vm191, %v396, 0
  %399 = vmatprep.subr.mxu0 0.0
  %400 = vmatpush1.msra.mxu0 %v187
  %401 = vmatprep.subr.mxu0 0.0
  %402 = vmatpush1.msra.mxu0 %v188
  %403 = vmatprep.subr.mxu0 0.0
  %404 = vmatpush1.msra.mxu0 %v189
  %405 = vmatprep.subr.mxu0 0.0
  %406 = vmatpush1.msra.mxu0 %v190
  %407 = vmatprep.subr.mxu0 0.0
  %408 = vmatpush1.msra.mxu0 0.0
  %409 = vmatprep.subr.mxu0 0.0
  %410 = vmatpush1.msra.mxu0 0.0
  %411 = vmatprep.subr.mxu0 0.0
  %412 = vmatpush1.msra.mxu0 0.0
  %413 = vmatprep.subr.mxu0 0.0
  %414 = vmatpush1.msra.mxu0 0.0
  %415 = vmatprep.subr.mxu0 0.0
  %416 = vmatpush1.msra.mxu0 0.0
  %417 = vmatprep.subr.mxu0 0.0
  %418 = vmatpush1.msra.mxu0 0.0
  %419 = vmatprep.subr.mxu0 0.0
  %420 = vmatpush1.msra.mxu0 0.0
  %421 = vmatprep.subr.mxu0 0.0
  %422 = vmatpush1.msra.mxu0 0.0
  %423 = vmatprep.subr.mxu0 0.0
  %424 = vmatpush1.msra.mxu0 0.0
  %425 = vmatprep.subr.mxu0 0.0
  %426 = vmatpush1.msra.mxu0 0.0
  %427 = vmatprep.subr.mxu0 0.0
  %428 = vmatpush1.msra.mxu0 0.0
  %429 = vmatprep.subr.mxu0 0.0
  %430 = vmatpush1.msra.mxu0 0.0
  %431 = vmatprep.subr.mxu0 0.0
  %432 = vmatpush1.msra.mxu0 0.0
  %433 = vmatprep.subr.mxu0 0.0
  %434 = vmatpush1.msra.mxu0 0.0
  %435 = vmatprep.subr.mxu0 0.0
  %436 = vmatpush1.msra.mxu0 0.0
  %437 = vmatprep.subr.mxu0 0.0
  %438 = vmatpush1.msra.mxu0 0.0
  %439 = vmatprep.subr.mxu0 0.0
  %440 = vmatpush1.msra.mxu0 0.0
  %441 = vmatprep.subr.mxu0 0.0
  %442 = vmatpush1.msra.mxu0 0.0
  %443 = vmatprep.subr.mxu0 0.0
  %444 = vmatpush1.msra.mxu0 0.0
  %445 = vmatprep.subr.mxu0 0.0
  %446 = vmatpush1.msra.mxu0 0.0
  %447 = vmatprep.subr.mxu0 0.0
  %448 = vmatpush1.msra.mxu0 0.0
  %449 = vmatprep.subr.mxu0 0.0
  %450 = vmatpush1.msra.mxu0 0.0
  %451 = vmatprep.subr.mxu0 0.0
  %452 = vmatpush1.msra.mxu0 0.0
  %453 = vmatprep.subr.mxu0 0.0
  %454 = vmatpush1.msra.mxu0 0.0
  %455 = vmatprep.subr.mxu0 0.0
  %456 = vmatpush1.msra.mxu0 0.0
  %457 = vmatprep.subr.mxu0 0.0
  %458 = vmatpush1.msra.mxu0 0.0
  %459 = vmatprep.subr.mxu0 0.0
  %460 = vmatpush1.msra.mxu0 0.0
  %461 = vmatprep.subr.mxu0 0.0
  %462 = vmatpush1.msra.mxu0 0.0
  %463 = vmatprep.mubr.f32.mxu0 0.0
  %464 = vmatmul.mubr.f32.gmra.mrb[0].mxu0 %v397
  %v465 = vpop.f32.mrb[0].mxu0
  %v466 = vadd.f32 0.0, %v465
  %v467 = vpop.f32.mrb[0].mxu0
  %468 = vdwg.mxu0
  %v469 = vadd.f32 %v393, %v466
  %v470 = vmul.f32 %v469, %v183
  %v471 = vtanh.pop %v470
  %v472 = vmul.f32 %v471, 0.5
  %v473 = vadd.f32 %v472, 0.5
  %v474 = vsel %vm182, %v471, %v473
  %v475 = vmul.f32 %v474, %v385
  %477 = vrot.lane.b32.xlu0 %v474, 64
  %v478 = vpop.permute.xlu0 %477
  %v480 = vmul.f32 %v474, %v478
  %482 = vrot.lane.b32.xlu0 %v480, 32
  %v483 = vpop.permute.xlu0 %482
  %v485 = vadd.f32 %v475, %v483
  %v486 = vtanh.pop %v485
  %488 = vrot.lane.b32.xlu0 %v486, 64
  %v489 = vpop.permute.xlu0 %488
  %v491 = vmul.f32 %v474, %v489
  %s492 = scalar_lea.vmem [#allocation2], 24
  %v493 = vld [vmem:[%s492] sm:$0xff]
  %495 = vrot.lane.b32.xlu0 %v491, 32
  %v496 = vpop.permute.xlu0 %495
  %v497 = vsel %vm191, %v496, 0
  %499 = vmatprep.subr.mxu0 0.0
  %500 = vmatpush1.msra.mxu0 %v187
  %501 = vmatprep.subr.mxu0 0.0
  %502 = vmatpush1.msra.mxu0 %v188
  %503 = vmatprep.subr.mxu0 0.0
  %504 = vmatpush1.msra.mxu0 %v189
  %505 = vmatprep.subr.mxu0 0.0
  %506 = vmatpush1.msra.mxu0 %v190
  %507 = vmatprep.subr.mxu0 0.0
  %508 = vmatpush1.msra.mxu0 0.0
  %509 = vmatprep.subr.mxu0 0.0
  %510 = vmatpush1.msra.mxu0 0.0
  %511 = vmatprep.subr.mxu0 0.0
  %512 = vmatpush1.msra.mxu0 0.0
  %513 = vmatprep.subr.mxu0 0.0
  %514 = vmatpush1.msra.mxu0 0.0
  %515 = vmatprep.subr.mxu0 0.0
  %516 = vmatpush1.msra.mxu0 0.0
  %517 = vmatprep.subr.mxu0 0.0
  %518 = vmatpush1.msra.mxu0 0.0
  %519 = vmatprep.subr.mxu0 0.0
  %520 = vmatpush1.msra.mxu0 0.0
  %521 = vmatprep.subr.mxu0 0.0
  %522 = vmatpush1.msra.mxu0 0.0
  %523 = vmatprep.subr.mxu0 0.0
  %524 = vmatpush1.msra.mxu0 0.0
  %525 = vmatprep.subr.mxu0 0.0
  %526 = vmatpush1.msra.mxu0 0.0
  %527 = vmatprep.subr.mxu0 0.0
  %528 = vmatpush1.msra.mxu0 0.0
  %529 = vmatprep.subr.mxu0 0.0
  %530 = vmatpush1.msra.mxu0 0.0
  %531 = vmatprep.subr.mxu0 0.0
  %532 = vmatpush1.msra.mxu0 0.0
  %533 = vmatprep.subr.mxu0 0.0
  %534 = vmatpush1.msra.mxu0 0.0
  %535 = vmatprep.subr.mxu0 0.0
  %536 = vmatpush1.msra.mxu0 0.0
  %537 = vmatprep.subr.mxu0 0.0
  %538 = vmatpush1.msra.mxu0 0.0
  %539 = vmatprep.subr.mxu0 0.0
  %540 = vmatpush1.msra.mxu0 0.0
  %541 = vmatprep.subr.mxu0 0.0
  %542 = vmatpush1.msra.mxu0 0.0
  %543 = vmatprep.subr.mxu0 0.0
  %544 = vmatpush1.msra.mxu0 0.0
  %545 = vmatprep.subr.mxu0 0.0
  %546 = vmatpush1.msra.mxu0 0.0
  %547 = vmatprep.subr.mxu0 0.0
  %548 = vmatpush1.msra.mxu0 0.0
  %549 = vmatprep.subr.mxu0 0.0
  %550 = vmatpush1.msra.mxu0 0.0
  %551 = vmatprep.subr.mxu0 0.0
  %552 = vmatpush1.msra.mxu0 0.0
  %553 = vmatprep.subr.mxu0 0.0
  %554 = vmatpush1.msra.mxu0 0.0
  %555 = vmatprep.subr.mxu0 0.0
  %556 = vmatpush1.msra.mxu0 0.0
  %557 = vmatprep.subr.mxu0 0.0
  %558 = vmatpush1.msra.mxu0 0.0
  %559 = vmatprep.subr.mxu0 0.0
  %560 = vmatpush1.msra.mxu0 0.0
  %561 = vmatprep.subr.mxu0 0.0
  %562 = vmatpush1.msra.mxu0 0.0
  %563 = vmatprep.mubr.f32.mxu0 0.0
  %564 = vmatmul.mubr.f32.gmra.mrb[0].mxu0 %v497
  %v565 = vpop.f32.mrb[0].mxu0
  %v566 = vadd.f32 0.0, %v565
  %v567 = vpop.f32.mrb[0].mxu0
  %568 = vdwg.mxu0
  %v569 = vadd.f32 %v493, %v566
  %v570 = vmul.f32 %v569, %v183
  %v571 = vtanh.pop %v570
  %v572 = vmul.f32 %v571, 0.5
  %v573 = vadd.f32 %v572, 0.5
  %v574 = vsel %vm182, %v571, %v573
  %v575 = vmul.f32 %v574, %v485
  %577 = vrot.lane.b32.xlu0 %v574, 64
  %v578 = vpop.permute.xlu0 %577
  %v580 = vmul.f32 %v574, %v578
  %582 = vrot.lane.b32.xlu0 %v580, 32
  %v583 = vpop.permute.xlu0 %582
  %v585 = vadd.f32 %v575, %v583
  %v586 = vtanh.pop %v585
  %588 = vrot.lane.b32.xlu0 %v586, 64
  %v589 = vpop.permute.xlu0 %588
  %v591 = vmul.f32 %v574, %v589
  %s592 = scalar_lea.vmem [#allocation2], 32
  %v593 = vld [vmem:[%s592] sm:$0xff]
  %595 = vrot.lane.b32.xlu0 %v591, 32
  %v596 = vpop.permute.xlu0 %595
  %v597 = vsel %vm191, %v596, 0
  %599 = vmatprep.subr.mxu0 0.0
  %600 = vmatpush1.msra.mxu0 %v187
  %601 = vmatprep.subr.mxu0 0.0
  %602 = vmatpush1.msra.mxu0 %v188
  %603 = vmatprep.subr.mxu0 0.0
  %604 = vmatpush1.msra.mxu0 %v189
  %605 = vmatprep.subr.mxu0 0.0
  %606 = vmatpush1.msra.mxu0 %v190
  %607 = vmatprep.subr.mxu0 0.0
  %608 = vmatpush1.msra.mxu0 0.0
  %609 = vmatprep.subr.mxu0 0.0
  %610 = vmatpush1.msra.mxu0 0.0
  %611 = vmatprep.subr.mxu0 0.0
  %612 = vmatpush1.msra.mxu0 0.0
  %613 = vmatprep.subr.mxu0 0.0
  %614 = vmatpush1.msra.mxu0 0.0
  %615 = vmatprep.subr.mxu0 0.0
  %616 = vmatpush1.msra.mxu0 0.0
  %617 = vmatprep.subr.mxu0 0.0
  %618 = vmatpush1.msra.mxu0 0.0
  %619 = vmatprep.subr.mxu0 0.0
  %620 = vmatpush1.msra.mxu0 0.0
  %621 = vmatprep.subr.mxu0 0.0
  %622 = vmatpush1.msra.mxu0 0.0
  %623 = vmatprep.subr.mxu0 0.0
  %624 = vmatpush1.msra.mxu0 0.0
  %625 = vmatprep.subr.mxu0 0.0
  %626 = vmatpush1.msra.mxu0 0.0
  %627 = vmatprep.subr.mxu0 0.0
  %628 = vmatpush1.msra.mxu0 0.0
  %629 = vmatprep.subr.mxu0 0.0
  %630 = vmatpush1.msra.mxu0 0.0
  %631 = vmatprep.subr.mxu0 0.0
  %632 = vmatpush1.msra.mxu0 0.0
  %633 = vmatprep.subr.mxu0 0.0
  %634 = vmatpush1.msra.mxu0 0.0
  %635 = vmatprep.subr.mxu0 0.0
  %636 = vmatpush1.msra.mxu0 0.0
  %637 = vmatprep.subr.mxu0 0.0
  %638 = vmatpush1.msra.mxu0 0.0
  %639 = vmatprep.subr.mxu0 0.0
  %640 = vmatpush1.msra.mxu0 0.0
  %641 = vmatprep.subr.mxu0 0.0
  %642 = vmatpush1.msra.mxu0 0.0
  %643 = vmatprep.subr.mxu0 0.0
  %644 = vmatpush1.msra.mxu0 0.0
  %645 = vmatprep.subr.mxu0 0.0
  %646 = vmatpush1.msra.mxu0 0.0
  %647 = vmatprep.subr.mxu0 0.0
  %648 = vmatpush1.msra.mxu0 0.0
  %649 = vmatprep.subr.mxu0 0.0
  %650 = vmatpush1.msra.mxu0 0.0
  %651 = vmatprep.subr.mxu0 0.0
  %652 = vmatpush1.msra.mxu0 0.0
  %653 = vmatprep.subr.mxu0 0.0
  %654 = vmatpush1.msra.mxu0 0.0
  %655 = vmatprep.subr.mxu0 0.0
  %656 = vmatpush1.msra.mxu0 0.0
  %657 = vmatprep.subr.mxu0 0.0
  %658 = vmatpush1.msra.mxu0 0.0
  %659 = vmatprep.subr.mxu0 0.0
  %660 = vmatpush1.msra.mxu0 0.0
  %661 = vmatprep.subr.mxu0 0.0
  %662 = vmatpush1.msra.mxu0 0.0
  %663 = vmatprep.mubr.f32.mxu0 0.0
  %664 = vmatmul.mubr.f32.gmra.mrb[0].mxu0 %v597
  %v665 = vpop.f32.mrb[0].mxu0
  %v666 = vadd.f32 0.0, %v665
  %v667 = vpop.f32.mrb[0].mxu0
  %668 = vdwg.mxu0
  %v669 = vadd.f32 %v593, %v666
  %v670 = vmul.f32 %v669, %v183
  %v671 = vtanh.pop %v670
  %v672 = vmul.f32 %v671, 0.5
  %v673 = vadd.f32 %v672, 0.5
  %v674 = vsel %vm182, %v671, %v673
  %v675 = vmul.f32 %v674, %v585
  %677 = vrot.lane.b32.xlu0 %v674, 64
  %v678 = vpop.permute.xlu0 %677
  %v680 = vmul.f32 %v674, %v678
  %682 = vrot.lane.b32.xlu0 %v680, 32
  %v683 = vpop.permute.xlu0 %682
  %v685 = vadd.f32 %v675, %v683
  %v686 = vtanh.pop %v685
  %688 = vrot.lane.b32.xlu0 %v686, 64
  %v689 = vpop.permute.xlu0 %688
  %v691 = vmul.f32 %v674, %v689
  %s692 = scalar_lea.vmem [#allocation2], 40
  %v693 = vld [vmem:[%s692] sm:$0xff]
  %695 = vrot.lane.b32.xlu0 %v691, 32
  %v696 = vpop.permute.xlu0 %695
  %v697 = vsel %vm191, %v696, 0
  %699 = vmatprep.subr.mxu0 0.0
  %700 = vmatpush1.msra.mxu0 %v187
  %701 = vmatprep.subr.mxu0 0.0
  %702 = vmatpush1.msra.mxu0 %v188
  %703 = vmatprep.subr.mxu0 0.0
  %704 = vmatpush1.msra.mxu0 %v189
  %705 = vmatprep.subr.mxu0 0.0
  %706 = vmatpush1.msra.mxu0 %v190
  %707 = vmatprep.subr.mxu0 0.0
  %708 = vmatpush1.msra.mxu0 0.0
  %709 = vmatprep.subr.mxu0 0.0
  %710 = vmatpush1.msra.mxu0 0.0
  %711 = vmatprep.subr.mxu0 0.0
  %712 = vmatpush1.msra.mxu0 0.0
  %713 = vmatprep.subr.mxu0 0.0
  %714 = vmatpush1.msra.mxu0 0.0
  %715 = vmatprep.subr.mxu0 0.0
  %716 = vmatpush1.msra.mxu0 0.0
  %717 = vmatprep.subr.mxu0 0.0
  %718 = vmatpush1.msra.mxu0 0.0
  %719 = vmatprep.subr.mxu0 0.0
  %720 = vmatpush1.msra.mxu0 0.0
  %721 = vmatprep.subr.mxu0 0.0
  %722 = vmatpush1.msra.mxu0 0.0
  %723 = vmatprep.subr.mxu0 0.0
  %724 = vmatpush1.msra.mxu0 0.0
  %725 = vmatprep.subr.mxu0 0.0
  %726 = vmatpush1.msra.mxu0 0.0
  %727 = vmatprep.subr.mxu0 0.0
  %728 = vmatpush1.msra.mxu0 0.0
  %729 = vmatprep.subr.mxu0 0.0
  %730 = vmatpush1.msra.mxu0 0.0
  %731 = vmatprep.subr.mxu0 0.0
  %732 = vmatpush1.msra.mxu0 0.0
  %733 = vmatprep.subr.mxu0 0.0
  %734 = vmatpush1.msra.mxu0 0.0
  %735 = vmatprep.subr.mxu0 0.0
  %736 = vmatpush1.msra.mxu0 0.0
  %737 = vmatprep.subr.mxu0 0.0
  %738 = vmatpush1.msra.mxu0 0.0
  %739 = vmatprep.subr.mxu0 0.0
  %740 = vmatpush1.msra.mxu0 0.0
  %741 = vmatprep.subr.mxu0 0.0
  %742 = vmatpush1.msra.mxu0 0.0
  %743 = vmatprep.subr.mxu0 0.0
  %744 = vmatpush1.msra.mxu0 0.0
  %745 = vmatprep.subr.mxu0 0.0
  %746 = vmatpush1.msra.mxu0 0.0
  %747 = vmatprep.subr.mxu0 0.0
  %748 = vmatpush1.msra.mxu0 0.0
  %749 = vmatprep.subr.mxu0 0.0
  %750 = vmatpush1.msra.mxu0 0.0
  %751 = vmatprep.subr.mxu0 0.0
  %752 = vmatpush1.msra.mxu0 0.0
  %753 = vmatprep.subr.mxu0 0.0
  %754 = vmatpush1.msra.mxu0 0.0
  %755 = vmatprep.subr.mxu0 0.0
  %756 = vmatpush1.msra.mxu0 0.0
  %757 = vmatprep.subr.mxu0 0.0
  %758 = vmatpush1.msra.mxu0 0.0
  %759 = vmatprep.subr.mxu0 0.0
  %760 = vmatpush1.msra.mxu0 0.0
  %761 = vmatprep.subr.mxu0 0.0
  %762 = vmatpush1.msra.mxu0 0.0
  %763 = vmatprep.mubr.f32.mxu0 0.0
  %764 = vmatmul.mubr.f32.gmra.mrb[0].mxu0 %v697
  %v765 = vpop.f32.mrb[0].mxu0
  %v766 = vadd.f32 0.0, %v765
  %v767 = vpop.f32.mrb[0].mxu0
  %768 = vdwg.mxu0
  %v769 = vadd.f32 %v693, %v766
  %v770 = vmul.f32 %v769, %v183
  %v771 = vtanh.pop %v770
  %v772 = vmul.f32 %v771, 0.5
  %v773 = vadd.f32 %v772, 0.5
  %v774 = vsel %vm182, %v771, %v773
  %v775 = vmul.f32 %v774, %v685
  %777 = vrot.lane.b32.xlu0 %v774, 64
  %v778 = vpop.permute.xlu0 %777
  %v780 = vmul.f32 %v774, %v778
  %782 = vrot.lane.b32.xlu0 %v780, 32
  %v783 = vpop.permute.xlu0 %782
  %v785 = vadd.f32 %v775, %v783
  %v786 = vtanh.pop %v785
  %788 = vrot.lane.b32.xlu0 %v786, 64
  %v789 = vpop.permute.xlu0 %788
  %v791 = vmul.f32 %v774, %v789
  %s792 = scalar_lea.vmem [#allocation2], 48
  %v793 = vld [vmem:[%s792] sm:$0xff]
  %795 = vrot.lane.b32.xlu0 %v791, 32
  %v796 = vpop.permute.xlu0 %795
  %v797 = vsel %vm191, %v796, 0
  %799 = vmatprep.subr.mxu0 0.0
  %800 = vmatpush1.msra.mxu0 %v187
  %801 = vmatprep.subr.mxu0 0.0
  %802 = vmatpush1.msra.mxu0 %v188
  %803 = vmatprep.subr.mxu0 0.0
  %804 = vmatpush1.msra.mxu0 %v189
  %805 = vmatprep.subr.mxu0 0.0
  %806 = vmatpush1.msra.mxu0 %v190
  %807 = vmatprep.subr.mxu0 0.0
  %808 = vmatpush1.msra.mxu0 0.0
  %809 = vmatprep.subr.mxu0 0.0
  %810 = vmatpush1.msra.mxu0 0.0
  %811 = vmatprep.subr.mxu0 0.0
  %812 = vmatpush1.msra.mxu0 0.0
  %813 = vmatprep.subr.mxu0 0.0
  %814 = vmatpush1.msra.mxu0 0.0
  %815 = vmatprep.subr.mxu0 0.0
  %816 = vmatpush1.msra.mxu0 0.0
  %817 = vmatprep.subr.mxu0 0.0
  %818 = vmatpush1.msra.mxu0 0.0
  %819 = vmatprep.subr.mxu0 0.0
  %820 = vmatpush1.msra.mxu0 0.0
  %821 = vmatprep.subr.mxu0 0.0
  %822 = vmatpush1.msra.mxu0 0.0
  %823 = vmatprep.subr.mxu0 0.0
  %824 = vmatpush1.msra.mxu0 0.0
  %825 = vmatprep.subr.mxu0 0.0
  %826 = vmatpush1.msra.mxu0 0.0
  %827 = vmatprep.subr.mxu0 0.0
  %828 = vmatpush1.msra.mxu0 0.0
  %829 = vmatprep.subr.mxu0 0.0
  %830 = vmatpush1.msra.mxu0 0.0
  %831 = vmatprep.subr.mxu0 0.0
  %832 = vmatpush1.msra.mxu0 0.0
  %833 = vmatprep.subr.mxu0 0.0
  %834 = vmatpush1.msra.mxu0 0.0
  %835 = vmatprep.subr.mxu0 0.0
  %836 = vmatpush1.msra.mxu0 0.0
  %837 = vmatprep.subr.mxu0 0.0
  %838 = vmatpush1.msra.mxu0 0.0
  %839 = vmatprep.subr.mxu0 0.0
  %840 = vmatpush1.msra.mxu0 0.0
  %841 = vmatprep.subr.mxu0 0.0
  %842 = vmatpush1.msra.mxu0 0.0
  %843 = vmatprep.subr.mxu0 0.0
  %844 = vmatpush1.msra.mxu0 0.0
  %845 = vmatprep.subr.mxu0 0.0
  %846 = vmatpush1.msra.mxu0 0.0
  %847 = vmatprep.subr.mxu0 0.0
  %848 = vmatpush1.msra.mxu0 0.0
  %849 = vmatprep.subr.mxu0 0.0
  %850 = vmatpush1.msra.mxu0 0.0
  %851 = vmatprep.subr.mxu0 0.0
  %852 = vmatpush1.msra.mxu0 0.0
  %853 = vmatprep.subr.mxu0 0.0
  %854 = vmatpush1.msra.mxu0 0.0
  %855 = vmatprep.subr.mxu0 0.0
  %856 = vmatpush1.msra.mxu0 0.0
  %857 = vmatprep.subr.mxu0 0.0
  %858 = vmatpush1.msra.mxu0 0.0
  %859 = vmatprep.subr.mxu0 0.0
  %860 = vmatpush1.msra.mxu0 0.0
  %861 = vmatprep.subr.mxu0 0.0
  %862 = vmatpush1.msra.mxu0 0.0
  %863 = vmatprep.mubr.f32.mxu0 0.0
  %864 = vmatmul.mubr.f32.gmra.mrb[0].mxu0 %v797
  %v865 = vpop.f32.mrb[0].mxu0
  %v866 = vadd.f32 0.0, %v865
  %v867 = vpop.f32.mrb[0].mxu0
  %868 = vdwg.mxu0
  %v869 = vadd.f32 %v793, %v866
  %v870 = vmul.f32 %v869, %v183
  %v871 = vtanh.pop %v870
  %v872 = vmul.f32 %v871, 0.5
  %v873 = vadd.f32 %v872, 0.5
  %v874 = vsel %vm182, %v871, %v873
  %v875 = vmul.f32 %v874, %v785
  %877 = vrot.lane.b32.xlu0 %v874, 64
  %v878 = vpop.permute.xlu0 %877
  %v880 = vmul.f32 %v874, %v878
  %882 = vrot.lane.b32.xlu0 %v880, 32
  %v883 = vpop.permute.xlu0 %882
  %v885 = vadd.f32 %v875, %v883
  %v886 = vtanh.pop %v885
  %888 = vrot.lane.b32.xlu0 %v886, 64
  %v889 = vpop.permute.xlu0 %888
  %v891 = vmul.f32 %v874, %v889
  %s892 = scalar_lea.vmem [#allocation2], 56
  %v893 = vld [vmem:[%s892] sm:$0xff]
  %895 = vrot.lane.b32.xlu0 %v891, 32
  %v896 = vpop.permute.xlu0 %895
  %v897 = vsel %vm191, %v896, 0
  %899 = vmatprep.subr.mxu0 0.0
  %900 = vmatpush1.msra.mxu0 %v187
  %901 = vmatprep.subr.mxu0 0.0
  %902 = vmatpush1.msra.mxu0 %v188
  %903 = vmatprep.subr.mxu0 0.0
  %904 = vmatpush1.msra.mxu0 %v189
  %905 = vmatprep.subr.mxu0 0.0
  %906 = vmatpush1.msra.mxu0 %v190
  %907 = vmatprep.subr.mxu0 0.0
  %908 = vmatpush1.msra.mxu0 0.0
  %909 = vmatprep.subr.mxu0 0.0
  %910 = vmatpush1.msra.mxu0 0.0
  %911 = vmatprep.subr.mxu0 0.0
  %912 = vmatpush1.msra.mxu0 0.0
  %913 = vmatprep.subr.mxu0 0.0
  %914 = vmatpush1.msra.mxu0 0.0
  %915 = vmatprep.subr.mxu0 0.0
  %916 = vmatpush1.msra.mxu0 0.0
  %917 = vmatprep.subr.mxu0 0.0
  %918 = vmatpush1.msra.mxu0 0.0
  %919 = vmatprep.subr.mxu0 0.0
  %920 = vmatpush1.msra.mxu0 0.0
  %921 = vmatprep.subr.mxu0 0.0
  %922 = vmatpush1.msra.mxu0 0.0
  %923 = vmatprep.subr.mxu0 0.0
  %924 = vmatpush1.msra.mxu0 0.0
  %925 = vmatprep.subr.mxu0 0.0
  %926 = vmatpush1.msra.mxu0 0.0
  %927 = vmatprep.subr.mxu0 0.0
  %928 = vmatpush1.msra.mxu0 0.0
  %929 = vmatprep.subr.mxu0 0.0
  %930 = vmatpush1.msra.mxu0 0.0
  %931 = vmatprep.subr.mxu0 0.0
  %932 = vmatpush1.msra.mxu0 0.0
  %933 = vmatprep.subr.mxu0 0.0
  %934 = vmatpush1.msra.mxu0 0.0
  %935 = vmatprep.subr.mxu0 0.0
  %936 = vmatpush1.msra.mxu0 0.0
  %937 = vmatprep.subr.mxu0 0.0
  %938 = vmatpush1.msra.mxu0 0.0
  %939 = vmatprep.subr.mxu0 0.0
  %940 = vmatpush1.msra.mxu0 0.0
  %941 = vmatprep.subr.mxu0 0.0
  %942 = vmatpush1.msra.mxu0 0.0
  %943 = vmatprep.subr.mxu0 0.0
  %944 = vmatpush1.msra.mxu0 0.0
  %945 = vmatprep.subr.mxu0 0.0
  %946 = vmatpush1.msra.mxu0 0.0
  %947 = vmatprep.subr.mxu0 0.0
  %948 = vmatpush1.msra.mxu0 0.0
  %949 = vmatprep.subr.mxu0 0.0
  %950 = vmatpush1.msra.mxu0 0.0
  %951 = vmatprep.subr.mxu0 0.0
  %952 = vmatpush1.msra.mxu0 0.0
  %953 = vmatprep.subr.mxu0 0.0
  %954 = vmatpush1.msra.mxu0 0.0
  %955 = vmatprep.subr.mxu0 0.0
  %956 = vmatpush1.msra.mxu0 0.0
  %957 = vmatprep.subr.mxu0 0.0
  %958 = vmatpush1.msra.mxu0 0.0
  %959 = vmatprep.subr.mxu0 0.0
  %960 = vmatpush1.msra.mxu0 0.0
  %961 = vmatprep.subr.mxu0 0.0
  %962 = vmatpush1.msra.mxu0 0.0
  %963 = vmatprep.mubr.f32.mxu0 0.0
  %964 = vmatmul.mubr.f32.gmra.mrb[0].mxu0 %v897
  %v965 = vpop.f32.mrb[0].mxu0
  %v966 = vadd.f32 0.0, %v965
  %v967 = vpop.f32.mrb[0].mxu0
  %968 = vdwg.mxu0
  %v969 = vadd.f32 %v893, %v966
  %v970 = vmul.f32 %v969, %v183
  %v971 = vtanh.pop %v970
  %v972 = vmul.f32 %v971, 0.5
  %v973 = vadd.f32 %v972, 0.5
  %v974 = vsel %vm182, %v971, %v973
  %v975 = vmul.f32 %v974, %v885
  %977 = vrot.lane.b32.xlu0 %v974, 64
  %v978 = vpop.permute.xlu0 %977
  %v980 = vmul.f32 %v974, %v978
  %982 = vrot.lane.b32.xlu0 %v980, 32
  %v983 = vpop.permute.xlu0 %982
  %v985 = vadd.f32 %v975, %v983
  %v986 = vtanh.pop %v985
  %988 = vrot.lane.b32.xlu0 %v986, 64
  %v989 = vpop.permute.xlu0 %988
  %v991 = vmul.f32 %v974, %v989
  %993 = vrot.lane.b32.xlu0 %v991, 32
  %v994 = vpop.permute.xlu0 %993
  %996 = vst.msk [vmem:[%s6] sm:$0xff] %vm191, %v994
  // Predicated region
  $region26: #{lstm_forward.1} parent=0 // pred_check
    _
  $region27: #{lstm_forward.1} parent=0 // pred_check_branch
    %998 = sbr.rel (0) target = $region29
  $region28: #{lstm_forward.1} parent=0 // pred_region
    _
  $region29: #{lstm_forward.1} parent=0 // pred_fallthru
    _
  // Predicated region
  $region30: #{lstm_forward.1} parent=0 // pred_check
    _
  $region31: #{lstm_forward.1} parent=0 // pred_check_branch
    %1000 = sbr.rel (0) target = $region33
  $region32: #{lstm_forward.1} parent=0 // pred_region
    _
  $region33: #{lstm_forward.1} parent=0 // pred_fallthru
    _

</llo_original>
